<compile_context>
chip_gen: v6e
topology: v6e:2x2x1
jax: 0.10.0
libtpu: 0.0.40
codegen_flags: <defaults>
</compile_context>

<pallas_src>
import jax
import jax.numpy as jnp
from jax.experimental import pallas as pl
from jax.experimental.pallas import tpu as pltpu

_TN_MAX = 8192  # max rows per grid step


def _predictor_kernel(x_ref, w1t_ref, b1_ref, w2_ref, o_ref):
    # x_ref: (TN, C)   w1t_ref: (C, C)   b1_ref: (1, C)   w2_ref: (1, C)
    # o_ref: (1, 1, TN) -- per-row outputs on the lane axis (lane-dense store)
    h = jnp.dot(x_ref[...], w1t_ref[...],            # MXU: [TN,C] @ [C,C]
                preferred_element_type=jnp.float32)
    h = jnp.maximum(h + b1_ref[...], 0.0)            # VPU: bias + ReLU
    # Second linear (C -> 1, no bias): contract C, land rows on lanes.
    # Same jnp.dot(q, k.T) idiom as attention; avoids the [C,1]-RHS matmul and
    # the lane-width-1 masked output stores of the previous version.
    o = jnp.dot(w2_ref[...], h.T,                    # [1,C] @ [C,TN] -> [1,TN]
                preferred_element_type=jnp.float32)
    o_ref[...] = o.reshape(o_ref.shape)


def basic_property_predictor(x, w1, b1, w2, *, tile_rows=_TN_MAX):
    """
    x  : [N, C] float32 node features
    w1 : [C, C] (PyTorch Linear weight, out x in)
    b1 : [C]
    w2 : [1, C] (PyTorch Linear weight, no bias)
    returns: [N] predicted property values
    """
    N, C = x.shape
    x = jnp.asarray(x, jnp.float32)
    # NOTE: if weights are reused across many calls, pre-transpose them once
    # outside the jit'd hot path to avoid a (tiny) repeated XLA transpose.
    w1t = jnp.asarray(w1, jnp.float32).T            # [C, C] so kernel does x @ w1t
    b1r = jnp.asarray(b1, jnp.float32).reshape(1, C)
    w2r = jnp.asarray(w2, jnp.float32).reshape(1, C)

    # Row tile: multiple of 128 so the (1, 1, TN) output block is lane-dense.
    tn = min(int(tile_rows), pl.cdiv(N, 128) * 128)
    g = pl.cdiv(N, tn)
    n_pad = g * tn
    if n_pad != N:
        x = jnp.pad(x, ((0, n_pad - N), (0, 0)))

    cost = pl.CostEstimate(
        flops=2 * n_pad * C * C + 4 * n_pad * C,
        transcendentals=0,
        bytes_accessed=4 * (n_pad * C + C * C + 2 * C + n_pad),
    )

    # Dropout with p=0.0 is the identity in both train and eval -> no-op here.
    # TODO(synk): training-mode dropout with p > 0 would need pltpu.prng_* in-kernel.
    out = pl.pallas_call(
        _predictor_kernel,
        out_shape=jax.ShapeDtypeStruct((g, 1, tn), jnp.float32),
        grid_spec=pl.GridSpec(
            grid=(g,),
            in_specs=[
                pl.BlockSpec((tn, C), lambda i: (i, 0)),   # x row tile (pipelined)
                pl.BlockSpec((C, C), lambda i: (0, 0)),    # w1t (VMEM-resident)
                pl.BlockSpec((1, C), lambda i: (0, 0)),    # b1
                pl.BlockSpec((1, C), lambda i: (0, 0)),    # w2 row
            ],
            out_specs=pl.BlockSpec((1, 1, tn), lambda i: (i, 0, 0)),
        ),
        compiler_params=pltpu.CompilerParams(
            dimension_semantics=("parallel",),
            vmem_limit_bytes=32 * 1024 * 1024,
        ),
        cost_estimate=cost,
    )(x, w1t, b1r, w2r)

    return out.reshape(-1)[:N]       # squeeze(1) -> [N]


def _reference(x, w1, b1, w2):
    h = jnp.maximum(x @ w1.T + b1, 0.0)
    return (h @ w2.T)[:, 0]


if __name__ == "__main__":
    key = jax.random.PRNGKey(0)

    # Small shapes consistent with the module: 8 nodes x 32 features.
    N, C = 8, 32
    kx, kw1, kb1, kw2 = jax.random.split(key, 4)
    bound = 1.0 / (C ** 0.5)
    x = jax.random.normal(kx, (N, C), dtype=jnp.float32)
    w1 = jax.random.uniform(kw1, (C, C), minval=-bound, maxval=bound,
                            dtype=jnp.float32)
    b1 = jax.random.uniform(kb1, (C,), minval=-bound, maxval=bound,
                            dtype=jnp.float32)
    w2 = jax.random.uniform(kw2, (1, C), minval=-bound, maxval=bound,
                            dtype=jnp.float32)

    y = jax.block_until_ready(basic_property_predictor(x, w1, b1, w2))
    y_ref = _reference(x, w1, b1, w2)
    assert y.shape == (N,)
    assert jnp.allclose(y, y_ref, atol=1e-4, rtol=1e-4), "mismatch vs reference"

    # Second check: exercise the multi-tile grid path (N not a tile multiple).
    N2 = 300
    x2 = jax.random.normal(jax.random.PRNGKey(1), (N2, C), dtype=jnp.float32)
    y2 = jax.block_until_ready(
        basic_property_predictor(x2, w1, b1, w2, tile_rows=128))
    y2_ref = _reference(x2, w1, b1, w2)
    assert y2.shape == (N2,)
    assert jnp.allclose(y2, y2_ref, atol=1e-4, rtol=1e-4), "mismatch (tiled path)"

    print("KERNEL_OK")
</pallas_src>

<mosaic_0001>
module attributes {stable_mosaic.version = 11 : i64} {
  func.func @_predictor_kernel(%arg0: i32, %arg1: memref<128x32xf32, #tpu.memory_space<vmem>>, %arg2: memref<32x32xf32, #tpu.memory_space<vmem>>, %arg3: memref<1x32xf32, #tpu.memory_space<vmem>>, %arg4: memref<1x32xf32, #tpu.memory_space<vmem>>, %arg5: memref<1x1x128xf32, #tpu.memory_space<vmem>>) attributes {dimension_semantics = [#tpu.dimension_semantics<parallel>], iteration_bounds = array<i64: 1>, scalar_prefetch = 0 : i64, scratch_operands = 0 : i64, tpu.core_type = #tpu.core_type<tc>, window_params = [{transform_indices = @transform_0, window_bounds = array<i64: 128, 32>}, {pipeline_mode = #tpu.pipeline_mode<synchronous>, transform_indices = @transform_1, window_bounds = array<i64: 32, 32>}, {pipeline_mode = #tpu.pipeline_mode<synchronous>, transform_indices = @transform_2, window_bounds = array<i64: 1, 32>}, {pipeline_mode = #tpu.pipeline_mode<synchronous>, transform_indices = @transform_3, window_bounds = array<i64: 1, 32>}, {transform_indices = @transform_4, window_bounds = array<i64: 1, 1, 128>}]} {
    %c0 = arith.constant 0 : index
    %c0_0 = arith.constant 0 : index
    %0 = vector.load %arg1[%c0, %c0_0] : memref<128x32xf32, #tpu.memory_space<vmem>>, vector<128x32xf32>
    %c0_1 = arith.constant 0 : index
    %c0_2 = arith.constant 0 : index
    %1 = vector.load %arg2[%c0_1, %c0_2] : memref<32x32xf32, #tpu.memory_space<vmem>>, vector<32x32xf32>
    %cst = arith.constant dense<0.000000e+00> : vector<128x32xf32>
    %2 = tpu.matmul %0, %1, %cst {dimension_numbers = #tpu.dot_dimension_numbers<[1], [0], [0], [1], [0, 0, 1, 1], [], []>} : vector<128x32xf32>, vector<32x32xf32>, vector<128x32xf32> -> vector<128x32xf32>
    %c0_3 = arith.constant 0 : index
    %c0_4 = arith.constant 0 : index
    %3 = vector.load %arg3[%c0_3, %c0_4] : memref<1x32xf32, #tpu.memory_space<vmem>>, vector<1x32xf32>
    %4 = vector.broadcast %3 : vector<1x32xf32> to vector<128x32xf32>
    %5 = arith.addf %2, %4 : vector<128x32xf32>
    %cst_5 = arith.constant 0.000000e+00 : f32
    %6 = vector.broadcast %cst_5 : f32 to vector<128x32xf32>
    %7 = arith.maximumf %5, %6 : vector<128x32xf32>
    %c0_6 = arith.constant 0 : index
    %c0_7 = arith.constant 0 : index
    %8 = vector.load %arg4[%c0_6, %c0_7] : memref<1x32xf32, #tpu.memory_space<vmem>>, vector<1x32xf32>
    %9 = tpu.transpose %7, [1, 0] : vector<128x32xf32> -> vector<32x128xf32>
    %cst_8 = arith.constant dense<0.000000e+00> : vector<1x128xf32>
    %10 = tpu.matmul %8, %9, %cst_8 {dimension_numbers = #tpu.dot_dimension_numbers<[1], [0], [0], [1], [0, 0, 1, 1], [], []>} : vector<1x32xf32>, vector<32x128xf32>, vector<1x128xf32> -> vector<1x128xf32>
    %11 = vector.shape_cast %10 : vector<1x128xf32> to vector<1x1x128xf32>
    %c0_9 = arith.constant 0 : index
    %c0_10 = arith.constant 0 : index
    %c0_11 = arith.constant 0 : index
    %12 = vector.load %arg5[%c0_9, %c0_10, %c0_11] : memref<1x1x128xf32, #tpu.memory_space<vmem>>, vector<1x1x128xf32>
    tpu.vector_store %arg5[%c0_9, %c0_10, %c0_11], %11 {strides = array<i32>} : memref<1x1x128xf32, #tpu.memory_space<vmem>>, vector<1x1x128xf32>,
    return
  }
  func.func @transform_0(%arg0: i32) -> (i32, i32) {
    %c0_i32 = arith.constant 0 : i32
    %c0_i32_0 = arith.constant 0 : i32
    return %arg0, %c0_i32 : i32, i32
  }
  func.func @transform_1(%arg0: i32) -> (i32, i32) {
    %c0_i32 = arith.constant 0 : i32
    %c0_i32_0 = arith.constant 0 : i32
    %c0_i32_1 = arith.constant 0 : i32
    return %c0_i32, %c0_i32_0 : i32, i32
  }
  func.func @transform_2(%arg0: i32) -> (i32, i32) {
    %c0_i32 = arith.constant 0 : i32
    %c0_i32_0 = arith.constant 0 : i32
    %c0_i32_1 = arith.constant 0 : i32
    return %c0_i32, %c0_i32_0 : i32, i32
  }
  func.func @transform_3(%arg0: i32) -> (i32, i32) {
    %c0_i32 = arith.constant 0 : i32
    %c0_i32_0 = arith.constant 0 : i32
    %c0_i32_1 = arith.constant 0 : i32
    return %c0_i32, %c0_i32_0 : i32, i32
  }
  func.func @transform_4(%arg0: i32) -> (i32, i32, i32) {
    %c0_i32 = arith.constant 0 : i32
    %c0_i32_0 = arith.constant 0 : i32
    %c0_i32_1 = arith.constant 0 : i32
    return %arg0, %c0_i32, %c0_i32_0 : i32, i32, i32
  }
}

</mosaic_0001>

<llo_original>
// kernel: tpu_custom_call.1
$region0: #{tpu_custom_call.1}
  #allocation0 [shape = 'u32[]', space=smem, size = 0x4, offset = 0x4, fixed_abs, tag = 'smem constant byte address 0x4 - core index']
  #allocation1 [shape = 'u32[144,128]{1,0:T(1,128)}', space=vmem, size = 0x12000, scoped, tag = 'internal scratch']
  %s0 = inlined_call_operand.vmem [shape: f32[128,32], index: 0, kind: input, shape index: {}]
  %s1 = inlined_call_operand.vmem [shape: f32[32,32], index: 1, kind: input, shape index: {}]
  %s2 = inlined_call_operand.vmem [shape: f32[1,32], index: 2, kind: input, shape index: {}]
  %s3 = inlined_call_operand.vmem [shape: f32[1,32], index: 3, kind: input, shape index: {}]
  %s4 = inlined_call_operand.hbm [shape: f32[1,1,128], index: 4, kind: output, shape index: {}]
  %s5 = sld [smem:[#allocation0]]
  $region26: #{tpu_custom_call.1} parent=0
    _
  %s7 = ssub.s32 1, %s5
  %s8 = scalar_select 0, %s7, %s5
  $region1: #{tpu_custom_call.1} parent=0
    #allocation2 [shape = 'u8[512]{0}', space=vmem, size = 0x400, scoped, tag = 'output window, operand 0, single buffered']
    #allocation3 [shape = 's32[1]{0}', space=sflag, size = 0x4, scoped, tag = 'scoped memory for tpu_custom_call.1']
    %9 = vsyncpa [#allocation3], 0
    // Predicated region
    $region2: #{tpu_custom_call.1} parent=1 // pred_check
      _
    $region3: #{tpu_custom_call.1} parent=1 // pred_check_branch
      %11 = sbr.rel (0) target = $region5
    $region4: #{tpu_custom_call.1} parent=1 // pred_region
      _
    $region5: #{tpu_custom_call.1} parent=1 // pred_fallthru
      _
    // Predicated region
    $region6: #{tpu_custom_call.1} parent=1 // pred_check
      _
    $region7: #{tpu_custom_call.1} parent=1 // pred_check_branch
      %13 = sbr.rel (0) target = $region9
    $region8: #{tpu_custom_call.1} parent=1 // pred_region
      _
    $region9: #{tpu_custom_call.1} parent=1 // pred_fallthru
      _
    // Predicated region
    $region10: #{tpu_custom_call.1} parent=1 // pred_check
      _
    $region11: #{tpu_custom_call.1} parent=1 // pred_check_branch
      %15 = sbr.rel (0) target = $region13
    $region12: #{tpu_custom_call.1} parent=1 // pred_region
      _
    $region13: #{tpu_custom_call.1} parent=1 // pred_fallthru
      _
    // Predicated region
    $region14: #{tpu_custom_call.1} parent=1 // pred_check
      _
    $region15: #{tpu_custom_call.1} parent=1 // pred_check_branch
      %17 = sbr.rel (0) target = $region17
    $region16: #{tpu_custom_call.1} parent=1 // pred_region
      _
    $region17: #{tpu_custom_call.1} parent=1 // pred_fallthru
      _
    %v18 = vld [vmem:[%s0] sm:$0xff]
    %v19 = vld [vmem:[%s0 + $0x8] sm:$0xff]
    %v20 = vld [vmem:[%s0 + $0x10] sm:$0xff]
    %v21 = vld [vmem:[%s0 + $0x18] sm:$0xff]
    %v22 = vld [vmem:[%s0 + $0x20] sm:$0xff]
    %v23 = vld [vmem:[%s0 + $0x28] sm:$0xff]
    %v24 = vld [vmem:[%s0 + $0x30] sm:$0xff]
    %v25 = vld [vmem:[%s0 + $0x38] sm:$0xff]
    %v26 = vld [vmem:[%s0 + $0x40] sm:$0xff]
    %v27 = vld [vmem:[%s0 + $0x48] sm:$0xff]
    %v28 = vld [vmem:[%s0 + $0x50] sm:$0xff]
    %v29 = vld [vmem:[%s0 + $0x58] sm:$0xff]
    %v30 = vld [vmem:[%s0 + $0x60] sm:$0xff]
    %v31 = vld [vmem:[%s0 + $0x68] sm:$0xff]
    %v32 = vld [vmem:[%s0 + $0x70] sm:$0xff]
    %v33 = vld [vmem:[%s0 + $0x78] sm:$0xff]
    %v34 = vld [vmem:[%s1] sm:$0xff]
    %v35 = vld [vmem:[%s1 + $0x8] sm:$0xff]
    %v36 = vld [vmem:[%s1 + $0x10] sm:$0xff]
    %v37 = vld [vmem:[%s1 + $0x18] sm:$0xff]
    %v38 = vld [vmem:[%s2] sm:$0x1]
    %v40 = vlaneseq
    %v41 = vshrl.u32 %v40, 7
    %v42 = vsub.s32 0, %v41
    %v43 = vrot.slane %v38, %v42
    %vm45 = vcmask 261120
    %v47 = vsel %vm45, %v18, 0
    %v50 = vsel %vm45, %v19, 0
    %v53 = vsel %vm45, %v20, 0
    %v56 = vsel %vm45, %v21, 0
    %v59 = vsel %vm45, %v22, 0
    %v62 = vsel %vm45, %v23, 0
    %v65 = vsel %vm45, %v24, 0
    %v68 = vsel %vm45, %v25, 0
    %v71 = vsel %vm45, %v26, 0
    %v74 = vsel %vm45, %v27, 0
    %v77 = vsel %vm45, %v28, 0
    %v80 = vsel %vm45, %v29, 0
    %v83 = vsel %vm45, %v30, 0
    %v86 = vsel %vm45, %v31, 0
    %v89 = vsel %vm45, %v32, 0
    %v92 = vsel %vm45, %v33, 0
    %94 = vmatprep.subr.mxu0 0.0
    %95 = vmatpush1.msra.mxu0 0.0
    %96 = vmatprep.subr.mxu0 0.0
    %97 = vmatpush1.msra.mxu0 0.0
    %98 = vmatprep.subr.mxu0 0.0
    %99 = vmatpush1.msra.mxu0 0.0
    %100 = vmatprep.subr.mxu0 0.0
    %101 = vmatpush1.msra.mxu0 0.0
    %102 = vmatprep.subr.mxu0 0.0
    %103 = vmatpush1.msra.mxu0 0.0
    %104 = vmatprep.subr.mxu0 0.0
    %105 = vmatpush1.msra.mxu0 0.0
    %106 = vmatprep.subr.mxu0 0.0
    %107 = vmatpush1.msra.mxu0 0.0
    %108 = vmatprep.subr.mxu0 0.0
    %109 = vmatpush1.msra.mxu0 0.0
    %110 = vmatprep.subr.mxu0 0.0
    %111 = vmatpush1.msra.mxu0 0.0
    %112 = vmatprep.subr.mxu0 0.0
    %113 = vmatpush1.msra.mxu0 0.0
    %114 = vmatprep.subr.mxu0 0.0
    %115 = vmatpush1.msra.mxu0 0.0
    %116 = vmatprep.subr.mxu0 0.0
    %117 = vmatpush1.msra.mxu0 0.0
    %118 = vmatprep.subr.mxu0 0.0
    %119 = vmatpush1.msra.mxu0 %v37
    %120 = vmatprep.subr.mxu0 0.0
    %121 = vmatpush1.msra.mxu0 %v36
    %122 = vmatprep.subr.mxu0 0.0
    %123 = vmatpush1.msra.mxu0 %v35
    %124 = vmatprep.subr.mxu0 0.0
    %125 = vmatpush1.msra.mxu0 %v34
    %126 = vmatprep.subr.mxu0 0.0
    %127 = vmatpush2.msra.mxu0 0.0
    %128 = vmatprep.subr.mxu0 0.0
    %129 = vmatpush2.msra.mxu0 0.0
    %130 = vmatprep.subr.mxu0 0.0
    %131 = vmatpush2.msra.mxu0 0.0
    %132 = vmatprep.subr.mxu0 0.0
    %133 = vmatpush2.msra.mxu0 0.0
    %134 = vmatprep.subr.mxu0 0.0
    %135 = vmatpush2.msra.mxu0 0.0
    %136 = vmatprep.subr.mxu0 0.0
    %137 = vmatpush2.msra.mxu0 0.0
    %138 = vmatprep.subr.mxu0 0.0
    %139 = vmatpush2.msra.mxu0 0.0
    %140 = vmatprep.subr.mxu0 0.0
    %141 = vmatpush2.msra.mxu0 0.0
    %142 = vmatprep.subr.mxu0 0.0
    %143 = vmatpush2.msra.mxu0 0.0
    %144 = vmatprep.subr.mxu0 0.0
    %145 = vmatpush2.msra.mxu0 0.0
    %146 = vmatprep.subr.mxu0 0.0
    %147 = vmatpush2.msra.mxu0 0.0
    %148 = vmatprep.subr.mxu0 0.0
    %149 = vmatpush2.msra.mxu0 0.0
    %150 = vmatprep.subr.mxu0 0.0
    %151 = vmatpush2.msra.mxu0 0.0
    %152 = vmatprep.subr.mxu0 0.0
    %153 = vmatpush2.msra.mxu0 0.0
    %154 = vmatprep.subr.mxu0 0.0
    %155 = vmatpush2.msra.mxu0 0.0
    %156 = vmatprep.subr.mxu0 0.0
    %157 = vmatpush2.msra.mxu0 0.0
    %158 = vmatprep.mubr.f32.mxu0 0.0
    %159 = vmatmul.mubr.f32.gmra.mxu0 %v47
    %v160 = vpop.f32.mrf.mxu0
    %v161 = vadd.f32 %v43, %v160
    %v162 = vpop.f32.mrf.mxu0
    %163 = vmatprep.mubr.f32.mxu0 0.0
    %164 = vmatmul.mubr.f32.gmra.mxu0 %v50
    %v165 = vpop.f32.mrf.mxu0
    %v166 = vadd.f32 %v43, %v165
    %v167 = vpop.f32.mrf.mxu0
    %168 = vmatprep.mubr.f32.mxu0 0.0
    %169 = vmatmul.mubr.f32.gmra.mxu0 %v53
    %v170 = vpop.f32.mrf.mxu0
    %v171 = vadd.f32 %v43, %v170
    %v172 = vpop.f32.mrf.mxu0
    %173 = vmatprep.mubr.f32.mxu0 0.0
    %174 = vmatmul.mubr.f32.gmra.mxu0 %v56
    %v175 = vpop.f32.mrf.mxu0
    %v176 = vadd.f32 %v43, %v175
    %v177 = vpop.f32.mrf.mxu0
    %178 = vmatprep.mubr.f32.mxu0 0.0
    %179 = vmatmul.mubr.f32.gmra.mxu0 %v59
    %v180 = vpop.f32.mrf.mxu0
    %v181 = vadd.f32 %v43, %v180
    %v182 = vpop.f32.mrf.mxu0
    %183 = vmatprep.mubr.f32.mxu0 0.0
    %184 = vmatmul.mubr.f32.gmra.mxu0 %v62
    %v185 = vpop.f32.mrf.mxu0
    %v186 = vadd.f32 %v43, %v185
    %v187 = vpop.f32.mrf.mxu0
    %188 = vmatprep.mubr.f32.mxu0 0.0
    %189 = vmatmul.mubr.f32.gmra.mxu0 %v65
    %v190 = vpop.f32.mrf.mxu0
    %v191 = vadd.f32 %v43, %v190
    %v192 = vpop.f32.mrf.mxu0
    %193 = vmatprep.mubr.f32.mxu0 0.0
    %194 = vmatmul.mubr.f32.gmra.mxu0 %v68
    %v195 = vpop.f32.mrf.mxu0
    %v196 = vadd.f32 %v43, %v195
    %v197 = vpop.f32.mrf.mxu0
    %198 = vmatprep.mubr.f32.mxu0 0.0
    %199 = vmatmul.mubr.f32.gmra.mxu0 %v71
    %v200 = vpop.f32.mrf.mxu0
    %v201 = vadd.f32 %v43, %v200
    %v202 = vpop.f32.mrf.mxu0
    %203 = vmatprep.mubr.f32.mxu0 0.0
    %204 = vmatmul.mubr.f32.gmra.mxu0 %v74
    %v205 = vpop.f32.mrf.mxu0
    %v206 = vadd.f32 %v43, %v205
    %v207 = vpop.f32.mrf.mxu0
    %208 = vmatprep.mubr.f32.mxu0 0.0
    %209 = vmatmul.mubr.f32.gmra.mxu0 %v77
    %v210 = vpop.f32.mrf.mxu0
    %v211 = vadd.f32 %v43, %v210
    %v212 = vpop.f32.mrf.mxu0
    %213 = vmatprep.mubr.f32.mxu0 0.0
    %214 = vmatmul.mubr.f32.gmra.mxu0 %v80
    %v215 = vpop.f32.mrf.mxu0
    %v216 = vadd.f32 %v43, %v215
    %v217 = vpop.f32.mrf.mxu0
    %218 = vmatprep.mubr.f32.mxu0 0.0
    %219 = vmatmul.mubr.f32.gmra.mxu0 %v83
    %v220 = vpop.f32.mrf.mxu0
    %v221 = vadd.f32 %v43, %v220
    %v222 = vpop.f32.mrf.mxu0
    %223 = vmatprep.mubr.f32.mxu0 0.0
    %224 = vmatmul.mubr.f32.gmra.mxu0 %v86
    %v225 = vpop.f32.mrf.mxu0
    %v226 = vadd.f32 %v43, %v225
    %v227 = vpop.f32.mrf.mxu0
    %228 = vmatprep.mubr.f32.mxu0 0.0
    %229 = vmatmul.mubr.f32.gmra.mxu0 %v89
    %v230 = vpop.f32.mrf.mxu0
    %v231 = vadd.f32 %v43, %v230
    %v232 = vpop.f32.mrf.mxu0
    %233 = vmatprep.mubr.f32.mxu0 0.0
    %234 = vmatmul.mubr.f32.gmra.mxu0 %v92
    %v235 = vpop.f32.mrf.mxu0
    %v236 = vadd.f32 %v43, %v235
    %v237 = vpop.f32.mrf.mxu0
    %238 = vdwg.mxu0
    %v239 = vmax.f32 %v161, 0.0
    %v240 = vmax.f32 %v166, 0.0
    %v241 = vmax.f32 %v171, 0.0
    %v242 = vmax.f32 %v176, 0.0
    %v243 = vmax.f32 %v181, 0.0
    %v244 = vmax.f32 %v186, 0.0
    %v245 = vmax.f32 %v191, 0.0
    %v246 = vmax.f32 %v196, 0.0
    %v247 = vmax.f32 %v201, 0.0
    %v248 = vmax.f32 %v206, 0.0
    %v249 = vmax.f32 %v211, 0.0
    %v250 = vmax.f32 %v216, 0.0
    %v251 = vmax.f32 %v221, 0.0
    %v252 = vmax.f32 %v226, 0.0
    %v253 = vmax.f32 %v231, 0.0
    %v254 = vmax.f32 %v236, 0.0
    %v255 = vld [vmem:[%s3] sm:$0x1]
    %v257 = vsel %vm45, %v255, 0
    %v260 = vsel %vm45, %v239, 0
    %v263 = vsel %vm45, %v240, 0
    %v266 = vsel %vm45, %v241, 0
    %v269 = vsel %vm45, %v242, 0
    %v272 = vsel %vm45, %v243, 0
    %v275 = vsel %vm45, %v244, 0
    %v278 = vsel %vm45, %v245, 0
    %v281 = vsel %vm45, %v246, 0
    %v284 = vsel %vm45, %v247, 0
    %v287 = vsel %vm45, %v248, 0
    %v290 = vsel %vm45, %v249, 0
    %v293 = vsel %vm45, %v250, 0
    %v296 = vsel %vm45, %v251, 0
    %v299 = vsel %vm45, %v252, 0
    %v302 = vsel %vm45, %v253, 0
    %v305 = vsel %vm45, %v254, 0
    %307 = vmatprep.subr.mxu0 0.0
    %308 = vmatpush1.xpose.msra.mxu0 %v305
    %309 = vmatprep.subr.mxu0 0.0
    %310 = vmatpush1.xpose.msra.mxu0 %v302
    %311 = vmatprep.subr.mxu0 0.0
    %312 = vmatpush1.xpose.msra.mxu0 %v299
    %313 = vmatprep.subr.mxu0 0.0
    %314 = vmatpush1.xpose.msra.mxu0 %v296
    %315 = vmatprep.subr.mxu0 0.0
    %316 = vmatpush1.xpose.msra.mxu0 %v293
    %317 = vmatprep.subr.mxu0 0.0
    %318 = vmatpush1.xpose.msra.mxu0 %v290
    %319 = vmatprep.subr.mxu0 0.0
    %320 = vmatpush1.xpose.msra.mxu0 %v287
    %321 = vmatprep.subr.mxu0 0.0
    %322 = vmatpush1.xpose.msra.mxu0 %v284
    %323 = vmatprep.subr.mxu0 0.0
    %324 = vmatpush1.xpose.msra.mxu0 %v281
    %325 = vmatprep.subr.mxu0 0.0
    %326 = vmatpush1.xpose.msra.mxu0 %v278
    %327 = vmatprep.subr.mxu0 0.0
    %328 = vmatpush1.xpose.msra.mxu0 %v275
    %329 = vmatprep.subr.mxu0 0.0
    %330 = vmatpush1.xpose.msra.mxu0 %v272
    %331 = vmatprep.subr.mxu0 0.0
    %332 = vmatpush1.xpose.msra.mxu0 %v269
    %333 = vmatprep.subr.mxu0 0.0
    %334 = vmatpush1.xpose.msra.mxu0 %v266
    %335 = vmatprep.subr.mxu0 0.0
    %336 = vmatpush1.xpose.msra.mxu0 %v263
    %337 = vmatprep.subr.mxu0 0.0
    %338 = vmatpush1.xpose.msra.mxu0 %v260
    %339 = vmatprep.subr.mxu0 0.0
    %340 = vmatpush2.xpose.msra.mxu0 0.0
    %341 = vmatprep.subr.mxu0 0.0
    %342 = vmatpush2.xpose.msra.mxu0 0.0
    %343 = vmatprep.subr.mxu0 0.0
    %344 = vmatpush2.xpose.msra.mxu0 0.0
    %345 = vmatprep.subr.mxu0 0.0
    %346 = vmatpush2.xpose.msra.mxu0 0.0
    %347 = vmatprep.subr.mxu0 0.0
    %348 = vmatpush2.xpose.msra.mxu0 0.0
    %349 = vmatprep.subr.mxu0 0.0
    %350 = vmatpush2.xpose.msra.mxu0 0.0
    %351 = vmatprep.subr.mxu0 0.0
    %352 = vmatpush2.xpose.msra.mxu0 0.0
    %353 = vmatprep.subr.mxu0 0.0
    %354 = vmatpush2.xpose.msra.mxu0 0.0
    %355 = vmatprep.subr.mxu0 0.0
    %356 = vmatpush2.xpose.msra.mxu0 0.0
    %357 = vmatprep.subr.mxu0 0.0
    %358 = vmatpush2.xpose.msra.mxu0 0.0
    %359 = vmatprep.subr.mxu0 0.0
    %360 = vmatpush2.xpose.msra.mxu0 0.0
    %361 = vmatprep.subr.mxu0 0.0
    %362 = vmatpush2.xpose.msra.mxu0 0.0
    %363 = vmatprep.subr.mxu0 0.0
    %364 = vmatpush2.xpose.msra.mxu0 0.0
    %365 = vmatprep.subr.mxu0 0.0
    %366 = vmatpush2.xpose.msra.mxu0 0.0
    %367 = vmatprep.subr.mxu0 0.0
    %368 = vmatpush2.xpose.msra.mxu0 0.0
    %369 = vmatprep.subr.mxu0 0.0
    %370 = vmatpush2.xpose.msra.mxu0 0.0
    %371 = vmatprep.mubr.f32.mxu0 0.0
    %372 = vmatmul.mubr.f32.gmra.mxu0 %v257
    %v373 = vpop.f32.mrf.mxu0
    %v374 = vadd.f32 0.0, %v373
    %v375 = vpop.f32.mrf.mxu0
    %376 = vdwg.mxu0
    %377 = vst [vmem:[#allocation2] sm:$0x1] %v374
    // Predicated region
    $region18: #{tpu_custom_call.1} parent=1 // pred_check
      _
    $region19: #{tpu_custom_call.1} parent=1 // pred_check_branch
      %379 = sbr.rel (0) target = $region21
    $region20: #{tpu_custom_call.1} parent=1 // pred_region
      %s381 = ssub.s32 16, 16
      %382 = vsyncadd [#allocation3], %s381
      %s384 = sshll.u32 [#allocation2], 4
      %s385 = int_to_ptr.vmem [resolvable:$true] %s384
      %387 = dma.vmem_to_hbm [thread:$0]  %s385, 16, %s4, [#allocation3]
    $region21: #{tpu_custom_call.1} parent=1 // pred_fallthru
      _
    // Predicated region
    $region22: #{tpu_custom_call.1} parent=1 // pred_check
      _
    $region23: #{tpu_custom_call.1} parent=1 // pred_check_branch
      %389 = sbr.rel (0) target = $region25
    $region24: #{tpu_custom_call.1} parent=1 // pred_region
      %390 = dma.done [#allocation3], 16
    $region25: #{tpu_custom_call.1} parent=1 // pred_fallthru
      _
    %391 = vsyncpa [#allocation3], 1

</llo_original>
